<compile_context>
chip_gen: v5e
topology: v5e:2x2
jax: 0.10.0
libtpu: 0.0.40
codegen_flags: <defaults>
</compile_context>

<pallas_src>
import jax
import jax.numpy as jnp
from jax import lax
from jax.experimental import pallas as pl
from jax.experimental.pallas import tpu as pltpu

HIDDEN1 = 100   # logical hidden sizes (match the PyTorch module)
HIDDEN2 = 20

# Lane-dense padded sizes used inside the kernel.
H1_PAD = 128
H2_PAD = 128
A_PAD = 128

_SQRT_HALF = 0.7071067811865476


def _gelu_exact(x):
    # PyTorch F.gelu default: exact erf-based GELU.
    return 0.5 * x * (1.0 + lax.erf(x * _SQRT_HALF))


def _round_up(n, m):
    return ((n + m - 1) // m) * m


def qnet_kernel(x_ref, w1_ref, b1_ref, w2_ref, b2_ref, w3_ref, b3_ref, o_ref):
    x = x_ref[...]  # already f32; no redundant cast
    h1 = _gelu_exact(
        jnp.dot(x, w1_ref[...], preferred_element_type=jnp.float32) + b1_ref[...])
    h2 = _gelu_exact(
        jnp.dot(h1, w2_ref[...], preferred_element_type=jnp.float32) + b2_ref[...])
    out = jnp.dot(h2, w3_ref[...], preferred_element_type=jnp.float32) + b3_ref[...]
    o_ref[...] = out.astype(o_ref.dtype)


def init_qnet_params(key, state_dim, action_dim):
    """Deterministic init mirroring the PyTorch module:
       weights ~ Normal(0, 0.1), biases = 0. Stored as [in, out]."""
    k1, k2, k3 = jax.random.split(key, 3)
    return {
        "w1": 0.1 * jax.random.normal(k1, (state_dim, HIDDEN1), jnp.float32),
        "b1": jnp.zeros((1, HIDDEN1), jnp.float32),
        "w2": 0.1 * jax.random.normal(k2, (HIDDEN1, HIDDEN2), jnp.float32),
        "b2": jnp.zeros((1, HIDDEN2), jnp.float32),
        "w3": 0.1 * jax.random.normal(k3, (HIDDEN2, action_dim), jnp.float32),
        "b3": jnp.zeros((1, action_dim), jnp.float32),
    }


def pad_params(params):
    """Zero-pad weights/biases to lane-dense (128-wide) feature dims.
    Exact: padded hidden lanes see 0 weight + 0 bias -> GELU(0)=0 -> contribute 0."""
    w1, b1 = params["w1"], params["b1"]
    w2, b2 = params["w2"], params["b2"]
    w3, b3 = params["w3"], params["b3"]
    s = w1.shape[0]
    return {
        "w1": jnp.zeros((s, H1_PAD), jnp.float32).at[:, :w1.shape[1]].set(w1),
        "b1": jnp.zeros((1, H1_PAD), jnp.float32).at[:, :b1.shape[1]].set(b1),
        "w2": jnp.zeros((H1_PAD, H2_PAD), jnp.float32)
                 .at[:w2.shape[0], :w2.shape[1]].set(w2),
        "b2": jnp.zeros((1, H2_PAD), jnp.float32).at[:, :b2.shape[1]].set(b2),
        "w3": jnp.zeros((H2_PAD, A_PAD), jnp.float32)
                 .at[:w3.shape[0], :w3.shape[1]].set(w3),
        "b3": jnp.zeros((1, A_PAD), jnp.float32).at[:, :b3.shape[1]].set(b3),
    }


def qnet_forward(x, padded_params, action_dim):
    """x: [B, state_dim] float32. padded_params: output of pad_params()."""
    B, state_dim = x.shape
    w1, b1 = padded_params["w1"], padded_params["b1"]
    w2, b2 = padded_params["w2"], padded_params["b2"]
    w3, b3 = padded_params["w3"], padded_params["b3"]

    # Batch tile: ~256 rows keeps the f32 GELU epilogue mostly in vregs while
    # amortizing per-step grid overhead; small batches fall back to one tile.
    TB = min(256, _round_up(max(B, 1), 8))
    B_pad = _round_up(B, TB)          # output is allocated padded, sliced below
    grid = (B_pad // TB,)

    # Weights/biases: constant index_map -> VMEM-resident across grid steps.
    resident = lambda a: pl.BlockSpec(a.shape, lambda i: (0,) * a.ndim)

    out_pad = pl.pallas_call(
        qnet_kernel,
        out_shape=jax.ShapeDtypeStruct((B_pad, A_PAD), jnp.float32),
        grid=grid,
        in_specs=[
            pl.BlockSpec((TB, state_dim), lambda i: (i, 0)),   # x: batch-tiled
            resident(w1), resident(b1),
            resident(w2), resident(b2),
            resident(w3), resident(b3),
        ],
        out_specs=pl.BlockSpec((TB, A_PAD), lambda i: (i, 0)),
        compiler_params=pltpu.CompilerParams(
            dimension_semantics=("parallel",)),   # megacore split on v7x
    )(x, w1, b1, w2, b2, w3, b3)

    return out_pad[:B, :action_dim]


def qnet_reference(x, params):
    g = lambda v: 0.5 * v * (1.0 + lax.erf(v * _SQRT_HALF))
    h1 = g(x @ params["w1"] + params["b1"])
    h2 = g(h1 @ params["w2"] + params["b2"])
    return h2 @ params["w3"] + params["b3"]


if __name__ == "__main__":
    key = jax.random.PRNGKey(0)
    kx, kx2, kp = jax.random.split(key, 3)

    batch = 2
    state_dim = 4     # e.g. CartPole-like observation
    action_dim = 2

    params = init_qnet_params(kp, state_dim, action_dim)
    padded = pad_params(params)

    # Tiny-batch path (single partial tile).
    x = jax.random.normal(kx, (batch, state_dim), jnp.float32)
    out = jax.block_until_ready(qnet_forward(x, padded, action_dim))
    ref = qnet_reference(x, params)
    assert out.shape == (batch, action_dim)
    assert jnp.allclose(out, ref, atol=1e-5, rtol=1e-5)

    # Larger batch exercises the tiled grid (partial last block is sliced off).
    x_big = jax.random.normal(kx2, (300, state_dim), jnp.float32)
    out_big = jax.block_until_ready(qnet_forward(x_big, padded, action_dim))
    ref_big = qnet_reference(x_big, params)
    assert out_big.shape == (300, action_dim)
    assert jnp.allclose(out_big, ref_big, atol=1e-5, rtol=1e-5)

    print("KERNEL_OK")
</pallas_src>

<mosaic_0001>
module attributes {stable_mosaic.version = 11 : i64} {
  func.func @qnet_kernel(%arg0: i32, %arg1: memref<8x4xf32, #tpu.memory_space<vmem>>, %arg2: memref<4x128xf32, #tpu.memory_space<vmem>>, %arg3: memref<1x128xf32, #tpu.memory_space<vmem>>, %arg4: memref<128x128xf32, #tpu.memory_space<vmem>>, %arg5: memref<1x128xf32, #tpu.memory_space<vmem>>, %arg6: memref<128x128xf32, #tpu.memory_space<vmem>>, %arg7: memref<1x128xf32, #tpu.memory_space<vmem>>, %arg8: memref<8x128xf32, #tpu.memory_space<vmem>>) attributes {dimension_semantics = [#tpu.dimension_semantics<parallel>], iteration_bounds = array<i64: 1>, scalar_prefetch = 0 : i64, scratch_operands = 0 : i64, tpu.core_type = #tpu.core_type<tc>, window_params = [{transform_indices = @transform_0, window_bounds = array<i64: 8, 4>}, {pipeline_mode = #tpu.pipeline_mode<synchronous>, transform_indices = @transform_1, window_bounds = array<i64: 4, 128>}, {pipeline_mode = #tpu.pipeline_mode<synchronous>, transform_indices = @transform_2, window_bounds = array<i64: 1, 128>}, {pipeline_mode = #tpu.pipeline_mode<synchronous>, transform_indices = @transform_3, window_bounds = array<i64: 128, 128>}, {pipeline_mode = #tpu.pipeline_mode<synchronous>, transform_indices = @transform_4, window_bounds = array<i64: 1, 128>}, {pipeline_mode = #tpu.pipeline_mode<synchronous>, transform_indices = @transform_5, window_bounds = array<i64: 128, 128>}, {pipeline_mode = #tpu.pipeline_mode<synchronous>, transform_indices = @transform_6, window_bounds = array<i64: 1, 128>}, {transform_indices = @transform_7, window_bounds = array<i64: 8, 128>}]} {
    %c0 = arith.constant 0 : index
    %c0_0 = arith.constant 0 : index
    %0 = vector.load %arg1[%c0, %c0_0] : memref<8x4xf32, #tpu.memory_space<vmem>>, vector<8x4xf32>
    %c0_1 = arith.constant 0 : index
    %c0_2 = arith.constant 0 : index
    %1 = vector.load %arg2[%c0_1, %c0_2] : memref<4x128xf32, #tpu.memory_space<vmem>>, vector<4x128xf32>
    %cst = arith.constant dense<0.000000e+00> : vector<8x128xf32>
    %2 = tpu.matmul %0, %1, %cst {dimension_numbers = #tpu.dot_dimension_numbers<[1], [0], [0], [1], [0, 0, 1, 1], [], []>} : vector<8x4xf32>, vector<4x128xf32>, vector<8x128xf32> -> vector<8x128xf32>
    %c0_3 = arith.constant 0 : index
    %c0_4 = arith.constant 0 : index
    %3 = vector.load %arg3[%c0_3, %c0_4] : memref<1x128xf32, #tpu.memory_space<vmem>>, vector<1x128xf32>
    %4 = vector.broadcast %3 : vector<1x128xf32> to vector<8x128xf32>
    %5 = arith.addf %2, %4 : vector<8x128xf32>
    %cst_5 = arith.constant 5.000000e-01 : f32
    %6 = vector.broadcast %cst_5 : f32 to vector<8x128xf32>
    %7 = arith.mulf %6, %5 : vector<8x128xf32>
    %cst_6 = arith.constant 0.707106769 : f32
    %8 = vector.broadcast %cst_6 : f32 to vector<8x128xf32>
    %9 = arith.mulf %5, %8 : vector<8x128xf32>
    %10 = math.erf %9 : vector<8x128xf32>
    %cst_7 = arith.constant 1.000000e+00 : f32
    %11 = vector.broadcast %cst_7 : f32 to vector<8x128xf32>
    %12 = arith.addf %11, %10 : vector<8x128xf32>
    %13 = arith.mulf %7, %12 : vector<8x128xf32>
    %c0_8 = arith.constant 0 : index
    %c0_9 = arith.constant 0 : index
    %14 = vector.load %arg4[%c0_8, %c0_9] : memref<128x128xf32, #tpu.memory_space<vmem>>, vector<128x128xf32>
    %cst_10 = arith.constant dense<0.000000e+00> : vector<8x128xf32>
    %15 = tpu.matmul %13, %14, %cst_10 {dimension_numbers = #tpu.dot_dimension_numbers<[1], [0], [0], [1], [0, 0, 1, 1], [], []>} : vector<8x128xf32>, vector<128x128xf32>, vector<8x128xf32> -> vector<8x128xf32>
    %c0_11 = arith.constant 0 : index
    %c0_12 = arith.constant 0 : index
    %16 = vector.load %arg5[%c0_11, %c0_12] : memref<1x128xf32, #tpu.memory_space<vmem>>, vector<1x128xf32>
    %17 = vector.broadcast %16 : vector<1x128xf32> to vector<8x128xf32>
    %18 = arith.addf %15, %17 : vector<8x128xf32>
    %cst_13 = arith.constant 5.000000e-01 : f32
    %19 = vector.broadcast %cst_13 : f32 to vector<8x128xf32>
    %20 = arith.mulf %19, %18 : vector<8x128xf32>
    %cst_14 = arith.constant 0.707106769 : f32
    %21 = vector.broadcast %cst_14 : f32 to vector<8x128xf32>
    %22 = arith.mulf %18, %21 : vector<8x128xf32>
    %23 = math.erf %22 : vector<8x128xf32>
    %cst_15 = arith.constant 1.000000e+00 : f32
    %24 = vector.broadcast %cst_15 : f32 to vector<8x128xf32>
    %25 = arith.addf %24, %23 : vector<8x128xf32>
    %26 = arith.mulf %20, %25 : vector<8x128xf32>
    %c0_16 = arith.constant 0 : index
    %c0_17 = arith.constant 0 : index
    %27 = vector.load %arg6[%c0_16, %c0_17] : memref<128x128xf32, #tpu.memory_space<vmem>>, vector<128x128xf32>
    %cst_18 = arith.constant dense<0.000000e+00> : vector<8x128xf32>
    %28 = tpu.matmul %26, %27, %cst_18 {dimension_numbers = #tpu.dot_dimension_numbers<[1], [0], [0], [1], [0, 0, 1, 1], [], []>} : vector<8x128xf32>, vector<128x128xf32>, vector<8x128xf32> -> vector<8x128xf32>
    %c0_19 = arith.constant 0 : index
    %c0_20 = arith.constant 0 : index
    %29 = vector.load %arg7[%c0_19, %c0_20] : memref<1x128xf32, #tpu.memory_space<vmem>>, vector<1x128xf32>
    %30 = vector.broadcast %29 : vector<1x128xf32> to vector<8x128xf32>
    %31 = arith.addf %28, %30 : vector<8x128xf32>
    %c0_21 = arith.constant 0 : index
    %c0_22 = arith.constant 0 : index
    %32 = vector.load %arg8[%c0_21, %c0_22] : memref<8x128xf32, #tpu.memory_space<vmem>>, vector<8x128xf32>
    tpu.vector_store %arg8[%c0_21, %c0_22], %31 {strides = array<i32>} : memref<8x128xf32, #tpu.memory_space<vmem>>, vector<8x128xf32>,
    return
  }
  func.func @transform_0(%arg0: i32) -> (i32, i32) {
    %c0_i32 = arith.constant 0 : i32
    %c0_i32_0 = arith.constant 0 : i32
    return %arg0, %c0_i32 : i32, i32
  }
  func.func @transform_1(%arg0: i32) -> (i32, i32) {
    %c0_i32 = arith.constant 0 : i32
    %c0_i32_0 = arith.constant 0 : i32
    %c0_i32_1 = arith.constant 0 : i32
    return %c0_i32, %c0_i32_0 : i32, i32
  }
  func.func @transform_2(%arg0: i32) -> (i32, i32) {
    %c0_i32 = arith.constant 0 : i32
    %c0_i32_0 = arith.constant 0 : i32
    %c0_i32_1 = arith.constant 0 : i32
    return %c0_i32, %c0_i32_0 : i32, i32
  }
  func.func @transform_3(%arg0: i32) -> (i32, i32) {
    %c0_i32 = arith.constant 0 : i32
    %c0_i32_0 = arith.constant 0 : i32
    %c0_i32_1 = arith.constant 0 : i32
    return %c0_i32, %c0_i32_0 : i32, i32
  }
  func.func @transform_4(%arg0: i32) -> (i32, i32) {
    %c0_i32 = arith.constant 0 : i32
    %c0_i32_0 = arith.constant 0 : i32
    %c0_i32_1 = arith.constant 0 : i32
    return %c0_i32, %c0_i32_0 : i32, i32
  }
  func.func @transform_5(%arg0: i32) -> (i32, i32) {
    %c0_i32 = arith.constant 0 : i32
    %c0_i32_0 = arith.constant 0 : i32
    %c0_i32_1 = arith.constant 0 : i32
    return %c0_i32, %c0_i32_0 : i32, i32
  }
  func.func @transform_6(%arg0: i32) -> (i32, i32) {
    %c0_i32 = arith.constant 0 : i32
    %c0_i32_0 = arith.constant 0 : i32
    %c0_i32_1 = arith.constant 0 : i32
    return %c0_i32, %c0_i32_0 : i32, i32
  }
  func.func @transform_7(%arg0: i32) -> (i32, i32) {
    %c0_i32 = arith.constant 0 : i32
    %c0_i32_0 = arith.constant 0 : i32
    return %arg0, %c0_i32 : i32, i32
  }
}

</mosaic_0001>

<llo_original>
// kernel: tpu_custom_call.1
$region0: #{tpu_custom_call.1}
  #allocation0 [shape = 'u32[]', space=smem, size = 0x4, offset = 0x4, fixed_abs, tag = 'smem constant byte address 0x4 - core index']
  #allocation1 [shape = 'u32[72,128]{1,0:T(1,128)}', space=vmem, size = 0x9000, scoped, tag = 'internal scratch']
  %s0 = inlined_call_operand.hbm [shape: f32[2,4], index: 0, kind: input, shape index: {}]
  %s1 = inlined_call_operand.hbm [shape: f32[4,128], index: 1, kind: input, shape index: {}]
  %s2 = inlined_call_operand.vmem [shape: f32[1,128], index: 2, kind: input, shape index: {}]
  %s3 = inlined_call_operand.hbm [shape: f32[128,128], index: 3, kind: input, shape index: {}]
  %s4 = inlined_call_operand.vmem [shape: f32[1,128], index: 4, kind: input, shape index: {}]
  %s5 = inlined_call_operand.hbm [shape: f32[128,128], index: 5, kind: input, shape index: {}]
  %s6 = inlined_call_operand.vmem [shape: f32[1,128], index: 6, kind: input, shape index: {}]
  %s7 = inlined_call_operand.hbm [shape: f32[8,128], index: 7, kind: output, shape index: {}]
  %s8 = sld [smem:[#allocation0]]
  $region54: #{tpu_custom_call.1} parent=0
    _
  %s10 = ssub.s32 1, %s8
  %s11 = scalar_select 0, %s10, %s8
  $region1: #{tpu_custom_call.1} parent=0
    #allocation2 [shape = 'u8[4096]{0}', space=vmem, size = 0x1000, scoped, tag = 'input window, operand 0, single buffered']
    #allocation3 [shape = 's32[1]{0}', space=sflag, size = 0x4, scoped, tag = 'scoped memory for tpu_custom_call.1']
    #allocation4 [shape = 's32[1]{0}', space=sflag, size = 0x4, scoped, tag = 'scoped memory for tpu_custom_call.1']
    #allocation5 [shape = 'u8[2048]{0}', space=vmem, size = 0x800, scoped, tag = 'input window, operand 1, single buffered']
    #allocation6 [shape = 's32[1]{0}', space=sflag, size = 0x4, scoped, tag = 'scoped memory for tpu_custom_call.1']
    #allocation7 [shape = 'u8[65536]{0}', space=vmem, size = 0x10000, scoped, tag = 'input window, operand 3, single buffered']
    #allocation8 [shape = 'u8[65536]{0}', space=vmem, size = 0x10000, scoped, tag = 'input window, operand 5, single buffered']
    #allocation9 [shape = 's32[1]{0}', space=sflag, size = 0x4, scoped, tag = 'scoped memory for tpu_custom_call.1']
    #allocation10 [shape = 'u8[4096]{0}', space=vmem, size = 0x1000, scoped, tag = 'output window, operand 0, single buffered']
    %12 = vsyncpa [#allocation3], 0
    %13 = vsyncpa [#allocation6], 0
    %14 = vsyncpa [#allocation9], 0
    %15 = vsyncpa [#allocation4], 0
    // Predicated region
    $region2: #{tpu_custom_call.1} parent=1 // pred_check
      _
    $region3: #{tpu_custom_call.1} parent=1 // pred_check_branch
      %17 = sbr.rel (0) target = $region5
    $region4: #{tpu_custom_call.1} parent=1 // pred_region
      %19 = vsyncadd [#allocation3], 96
      %s20 = sshll.u32 %s0, 4
      %s21 = int_to_ptr.hbm [resolvable:$true] %s20
      %s22 = sshll.u32 [#allocation2], 4
      %s23 = int_to_ptr.vmem [resolvable:$true] %s22
      %28 = dma.hbm_to_vmem [thread:$0]  %s21, 32, %s23, [#allocation3], 32, 32, 2
    $region5: #{tpu_custom_call.1} parent=1 // pred_fallthru
      _
    // Predicated region
    $region6: #{tpu_custom_call.1} parent=1 // pred_check
      _
    $region7: #{tpu_custom_call.1} parent=1 // pred_check_branch
      %30 = sbr.rel (0) target = $region9
    $region8: #{tpu_custom_call.1} parent=1 // pred_region
      %32 = vsyncadd [#allocation6], 0
      %s34 = sshll.u32 %s1, 4
      %s35 = int_to_ptr.hbm [resolvable:$true] %s34
      %s36 = sshll.u32 [#allocation5], 4
      %s37 = int_to_ptr.vmem [resolvable:$true] %s36
      %39 = dma.hbm_to_vmem [thread:$0]  %s35, 64, %s37, [#allocation6]
    $region9: #{tpu_custom_call.1} parent=1 // pred_fallthru
      _
    // Predicated region
    $region10: #{tpu_custom_call.1} parent=1 // pred_check
      _
    $region11: #{tpu_custom_call.1} parent=1 // pred_check_branch
      %41 = sbr.rel (0) target = $region13
    $region12: #{tpu_custom_call.1} parent=1 // pred_region
      _
    $region13: #{tpu_custom_call.1} parent=1 // pred_fallthru
      _
    // Predicated region
    $region14: #{tpu_custom_call.1} parent=1 // pred_check
      _
    $region15: #{tpu_custom_call.1} parent=1 // pred_check_branch
      %43 = sbr.rel (0) target = $region17
    $region16: #{tpu_custom_call.1} parent=1 // pred_region
      %45 = vsyncadd [#allocation6], 0
      %s46 = sshll.u32 %s3, 4
      %s47 = int_to_ptr.hbm [resolvable:$true] %s46
      %s48 = sshll.u32 [#allocation7], 4
      %s49 = int_to_ptr.vmem [resolvable:$true] %s48
      %54 = dma.hbm_to_vmem [thread:$0]  %s47, 2048, %s49, [#allocation6], 128, 128, 8
    $region17: #{tpu_custom_call.1} parent=1 // pred_fallthru
      _
    // Predicated region
    $region18: #{tpu_custom_call.1} parent=1 // pred_check
      _
    $region19: #{tpu_custom_call.1} parent=1 // pred_check_branch
      %56 = sbr.rel (0) target = $region21
    $region20: #{tpu_custom_call.1} parent=1 // pred_region
      _
    $region21: #{tpu_custom_call.1} parent=1 // pred_fallthru
      _
    // Predicated region
    $region22: #{tpu_custom_call.1} parent=1 // pred_check
      _
    $region23: #{tpu_custom_call.1} parent=1 // pred_check_branch
      %58 = sbr.rel (0) target = $region25
    $region24: #{tpu_custom_call.1} parent=1 // pred_region
      %60 = vsyncadd [#allocation9], 0
      %s61 = sshll.u32 %s5, 4
      %s62 = int_to_ptr.hbm [resolvable:$true] %s61
      %s63 = sshll.u32 [#allocation8], 4
      %s64 = int_to_ptr.vmem [resolvable:$true] %s63
      %69 = dma.hbm_to_vmem [thread:$0]  %s62, 2048, %s64, [#allocation9], 128, 128, 8
    $region25: #{tpu_custom_call.1} parent=1 // pred_fallthru
      _
    // Predicated region
    $region26: #{tpu_custom_call.1} parent=1 // pred_check
      _
    $region27: #{tpu_custom_call.1} parent=1 // pred_check_branch
      %71 = sbr.rel (0) target = $region29
    $region28: #{tpu_custom_call.1} parent=1 // pred_region
      _
    $region29: #{tpu_custom_call.1} parent=1 // pred_fallthru
      _
    // Predicated region
    $region30: #{tpu_custom_call.1} parent=1 // pred_check
      _
    $region31: #{tpu_custom_call.1} parent=1 // pred_check_branch
      %73 = sbr.rel (0) target = $region33
    $region32: #{tpu_custom_call.1} parent=1 // pred_region
      %75 = dma.done [#allocation3], 128
    $region33: #{tpu_custom_call.1} parent=1 // pred_fallthru
      _
    // Predicated region
    $region34: #{tpu_custom_call.1} parent=1 // pred_check
      _
    $region35: #{tpu_custom_call.1} parent=1 // pred_check_branch
      %77 = sbr.rel (0) target = $region37
    $region36: #{tpu_custom_call.1} parent=1 // pred_region
      %79 = dma.done [#allocation6], 64
    $region37: #{tpu_custom_call.1} parent=1 // pred_fallthru
      _
    // Predicated region
    $region38: #{tpu_custom_call.1} parent=1 // pred_check
      _
    $region39: #{tpu_custom_call.1} parent=1 // pred_check_branch
      %81 = sbr.rel (0) target = $region41
    $region40: #{tpu_custom_call.1} parent=1 // pred_region
      %83 = dma.done [#allocation6], 2048
    $region41: #{tpu_custom_call.1} parent=1 // pred_fallthru
      _
    // Predicated region
    $region42: #{tpu_custom_call.1} parent=1 // pred_check
      _
    $region43: #{tpu_custom_call.1} parent=1 // pred_check_branch
      %85 = sbr.rel (0) target = $region45
    $region44: #{tpu_custom_call.1} parent=1 // pred_region
      %87 = dma.done [#allocation9], 2048
    $region45: #{tpu_custom_call.1} parent=1 // pred_fallthru
      _
    %v88 = vld [vmem:[#allocation2] sm:$0xff]
    %v89 = vld [vmem:[#allocation5] sm:$0xf]
    %v90 = vld [vmem:[%s2] sm:$0x1]
    %v92 = vperm.slane %v90, 0
    %vm94 = vcmask 31744
    %v96 = vsel %vm94, %v88, 0
    %vm98 = vcmask 1043456
    %v100 = vsel %vm98, %v89, 0
    %102 = vmatpush.msra.mxu0 0.0
    %103 = vmatpush.msra.mxu0 0.0
    %104 = vmatpush.msra.mxu0 0.0
    %105 = vmatpush.msra.mxu0 0.0
    %106 = vmatpush.msra.mxu0 0.0
    %107 = vmatpush.msra.mxu0 0.0
    %108 = vmatpush.msra.mxu0 0.0
    %109 = vmatpush.msra.mxu0 0.0
    %110 = vmatpush.msra.mxu0 0.0
    %111 = vmatpush.msra.mxu0 0.0
    %112 = vmatpush.msra.mxu0 0.0
    %113 = vmatpush.msra.mxu0 0.0
    %114 = vmatpush.msra.mxu0 0.0
    %115 = vmatpush.msra.mxu0 0.0
    %116 = vmatpush.msra.mxu0 0.0
    %117 = vmatpush.msra.mxu0 %v100
    %118 = vmatmul.f32.gmra.mxu0 %v96
    %v119 = vpop.f32.mrf.mxu0
    %v120 = vadd.f32 %v92, %v119
    %121 = vdwg.mxu0
    %v122 = vmul.f32 %v120, 0.5
    %v123 = vmul.f32 %v120, 0.70710677
    %v124 = vmul.f32 %v123, %v123
    %v125 = vmin.f32 16.0, %v124
    %v126 = vmul.f32 %v125, 2.1237322e-06
    %v127 = vadd.f32 %v126, 0.00028619796
    %v128 = vmul.f32 %v125, %v127
    %v129 = vadd.f32 %v128, 0.0036580483
    %v130 = vmul.f32 %v125, %v129
    %v131 = vadd.f32 %v130, 0.05243302
    %v132 = vmul.f32 %v125, %v131
    %v133 = vadd.f32 %v132, 0.18741608
    %v134 = vmul.f32 %v125, %v133
    %v135 = vadd.f32 %v134, 1.1283791
    %v136 = vmul.f32 %v123, %v135
    %v137 = vmul.f32 %v125, 3.8918573e-05
    %v138 = vadd.f32 %v137, 0.001143296
    %v139 = vmul.f32 %v125, %v138
    %v140 = vadd.f32 %v139, 0.014752088
    %v141 = vmul.f32 %v125, %v140
    %v142 = vadd.f32 %v141, 0.112945676
    %v143 = vmul.f32 %v125, %v142
    %v144 = vadd.f32 %v143, 0.4994258
    %v145 = vmul.f32 %v125, %v144
    %v146 = vadd.f32 %v145, 1.0
    %v147 = vrcp.pop %v146
    %v148 = vmul.f32 %v146, %v147
    %v149 = vsub.f32 1.0, %v148
    %v150 = vmul.f32 %v147, %v149
    %v151 = vadd.f32 %v147, %v150
    %vm152 = vweird.f32 %v146
    %vm153 = vweird.f32 %v147
    %vm154 = vmor %vm152, %vm153
    %v155 = vsel %vm154, %v147, %v151
    %v156 = vand.u32 2147483647, %v146
    %vm157 = vcmp.eq.f32.partialorder %v156, 8.507059e+37
    %v158 = vand.u32 %v146, 2147483648
    %v159 = vor.u32 1.1754944e-38, %v158
    %v160 = vsel %vm157, %v159, %v155
    %v161 = vmul.f32 %v136, %v160
    %v162 = vmin.f32 %v161, 1.0
    %v163 = vmax.f32 %v162, -1.0
    %v164 = vadd.f32 %v163, 1.0
    %v165 = vmul.f32 %v122, %v164
    %v166 = vld [vmem:[#allocation7] sm:$0xff]
    %v167 = vld [vmem:[#allocation7 + $0x8] sm:$0xff]
    %v168 = vld [vmem:[#allocation7 + $0x10] sm:$0xff]
    %v169 = vld [vmem:[#allocation7 + $0x18] sm:$0xff]
    %v170 = vld [vmem:[#allocation7 + $0x20] sm:$0xff]
    %v171 = vld [vmem:[#allocation7 + $0x28] sm:$0xff]
    %v172 = vld [vmem:[#allocation7 + $0x30] sm:$0xff]
    %v173 = vld [vmem:[#allocation7 + $0x38] sm:$0xff]
    %v174 = vld [vmem:[#allocation7 + $0x40] sm:$0xff]
    %v175 = vld [vmem:[#allocation7 + $0x48] sm:$0xff]
    %v176 = vld [vmem:[#allocation7 + $0x50] sm:$0xff]
    %v177 = vld [vmem:[#allocation7 + $0x58] sm:$0xff]
    %v178 = vld [vmem:[#allocation7 + $0x60] sm:$0xff]
    %v179 = vld [vmem:[#allocation7 + $0x68] sm:$0xff]
    %v180 = vld [vmem:[#allocation7 + $0x70] sm:$0xff]
    %v181 = vld [vmem:[#allocation7 + $0x78] sm:$0xff]
    %v182 = vld [vmem:[%s4] sm:$0x1]
    %v184 = vperm.slane %v182, 0
    %186 = vmatpush.msra.mxu0 %v181
    %187 = vmatpush.msra.mxu0 %v180
    %188 = vmatpush.msra.mxu0 %v179
    %189 = vmatpush.msra.mxu0 %v178
    %190 = vmatpush.msra.mxu0 %v177
    %191 = vmatpush.msra.mxu0 %v176
    %192 = vmatpush.msra.mxu0 %v175
    %193 = vmatpush.msra.mxu0 %v174
    %194 = vmatpush.msra.mxu0 %v173
    %195 = vmatpush.msra.mxu0 %v172
    %196 = vmatpush.msra.mxu0 %v171
    %197 = vmatpush.msra.mxu0 %v170
    %198 = vmatpush.msra.mxu0 %v169
    %199 = vmatpush.msra.mxu0 %v168
    %200 = vmatpush.msra.mxu0 %v167
    %201 = vmatpush.msra.mxu0 %v166
    %202 = vmatmul.f32.gmra.mxu0 %v165
    %v203 = vpop.f32.mrf.mxu0
    %v204 = vadd.f32 %v184, %v203
    %205 = vdwg.mxu0
    %v206 = vmul.f32 %v204, 0.5
    %v207 = vmul.f32 %v204, 0.70710677
    %v208 = vmul.f32 %v207, %v207
    %v209 = vmin.f32 16.0, %v208
    %v210 = vmul.f32 %v209, 2.1237322e-06
    %v211 = vadd.f32 %v210, 0.00028619796
    %v212 = vmul.f32 %v209, %v211
    %v213 = vadd.f32 %v212, 0.0036580483
    %v214 = vmul.f32 %v209, %v213
    %v215 = vadd.f32 %v214, 0.05243302
    %v216 = vmul.f32 %v209, %v215
    %v217 = vadd.f32 %v216, 0.18741608
    %v218 = vmul.f32 %v209, %v217
    %v219 = vadd.f32 %v218, 1.1283791
    %v220 = vmul.f32 %v207, %v219
    %v221 = vmul.f32 %v209, 3.8918573e-05
    %v222 = vadd.f32 %v221, 0.001143296
    %v223 = vmul.f32 %v209, %v222
    %v224 = vadd.f32 %v223, 0.014752088
    %v225 = vmul.f32 %v209, %v224
    %v226 = vadd.f32 %v225, 0.112945676
    %v227 = vmul.f32 %v209, %v226
    %v228 = vadd.f32 %v227, 0.4994258
    %v229 = vmul.f32 %v209, %v228
    %v230 = vadd.f32 %v229, 1.0
    %v231 = vrcp.pop %v230
    %v232 = vmul.f32 %v230, %v231
    %v233 = vsub.f32 1.0, %v232
    %v234 = vmul.f32 %v231, %v233
    %v235 = vadd.f32 %v231, %v234
    %vm236 = vweird.f32 %v230
    %vm237 = vweird.f32 %v231
    %vm238 = vmor %vm236, %vm237
    %v239 = vsel %vm238, %v231, %v235
    %v240 = vand.u32 2147483647, %v230
    %vm241 = vcmp.eq.f32.partialorder %v240, 8.507059e+37
    %v242 = vand.u32 %v230, 2147483648
    %v243 = vor.u32 1.1754944e-38, %v242
    %v244 = vsel %vm241, %v243, %v239
    %v245 = vmul.f32 %v220, %v244
    %v246 = vmin.f32 %v245, 1.0
    %v247 = vmax.f32 %v246, -1.0
    %v248 = vadd.f32 %v247, 1.0
    %v249 = vmul.f32 %v206, %v248
    %v250 = vld [vmem:[#allocation8] sm:$0xff]
    %v251 = vld [vmem:[#allocation8 + $0x8] sm:$0xff]
    %v252 = vld [vmem:[#allocation8 + $0x10] sm:$0xff]
    %v253 = vld [vmem:[#allocation8 + $0x18] sm:$0xff]
    %v254 = vld [vmem:[#allocation8 + $0x20] sm:$0xff]
    %v255 = vld [vmem:[#allocation8 + $0x28] sm:$0xff]
    %v256 = vld [vmem:[#allocation8 + $0x30] sm:$0xff]
    %v257 = vld [vmem:[#allocation8 + $0x38] sm:$0xff]
    %v258 = vld [vmem:[#allocation8 + $0x40] sm:$0xff]
    %v259 = vld [vmem:[#allocation8 + $0x48] sm:$0xff]
    %v260 = vld [vmem:[#allocation8 + $0x50] sm:$0xff]
    %v261 = vld [vmem:[#allocation8 + $0x58] sm:$0xff]
    %v262 = vld [vmem:[#allocation8 + $0x60] sm:$0xff]
    %v263 = vld [vmem:[#allocation8 + $0x68] sm:$0xff]
    %v264 = vld [vmem:[#allocation8 + $0x70] sm:$0xff]
    %v265 = vld [vmem:[#allocation8 + $0x78] sm:$0xff]
    %v266 = vld [vmem:[%s6] sm:$0x1]
    %v268 = vperm.slane %v266, 0
    %270 = vmatpush.msra.mxu0 %v265
    %271 = vmatpush.msra.mxu0 %v264
    %272 = vmatpush.msra.mxu0 %v263
    %273 = vmatpush.msra.mxu0 %v262
    %274 = vmatpush.msra.mxu0 %v261
    %275 = vmatpush.msra.mxu0 %v260
    %276 = vmatpush.msra.mxu0 %v259
    %277 = vmatpush.msra.mxu0 %v258
    %278 = vmatpush.msra.mxu0 %v257
    %279 = vmatpush.msra.mxu0 %v256
    %280 = vmatpush.msra.mxu0 %v255
    %281 = vmatpush.msra.mxu0 %v254
    %282 = vmatpush.msra.mxu0 %v253
    %283 = vmatpush.msra.mxu0 %v252
    %284 = vmatpush.msra.mxu0 %v251
    %285 = vmatpush.msra.mxu0 %v250
    %286 = vmatmul.f32.gmra.mxu0 %v249
    %v287 = vpop.f32.mrf.mxu0
    %v288 = vadd.f32 %v268, %v287
    %289 = vdwg.mxu0
    %290 = vst [vmem:[#allocation10] sm:$0xff] %v288
    // Predicated region
    $region46: #{tpu_custom_call.1} parent=1 // pred_check
      _
    $region47: #{tpu_custom_call.1} parent=1 // pred_check_branch
      %292 = sbr.rel (0) target = $region49
    $region48: #{tpu_custom_call.1} parent=1 // pred_region
      %294 = vsyncadd [#allocation4], 0
      %s296 = sshll.u32 [#allocation10], 4
      %s297 = int_to_ptr.vmem [resolvable:$true] %s296
      %s298 = sshll.u32 %s7, 4
      %s299 = int_to_ptr.hbm [resolvable:$true] %s298
      %301 = dma.vmem_to_hbm [thread:$0]  %s297, 128, %s299, [#allocation4]
    $region49: #{tpu_custom_call.1} parent=1 // pred_fallthru
      _
    // Predicated region
    $region50: #{tpu_custom_call.1} parent=1 // pred_check
      _
    $region51: #{tpu_custom_call.1} parent=1 // pred_check_branch
      %303 = sbr.rel (0) target = $region53
    $region52: #{tpu_custom_call.1} parent=1 // pred_region
      %305 = dma.done [#allocation4], 128
    $region53: #{tpu_custom_call.1} parent=1 // pred_fallthru
      _
    %306 = vsyncpa [#allocation3], 1
    %307 = vsyncpa [#allocation6], 1
    %308 = vsyncpa [#allocation9], 1
    %309 = vsyncpa [#allocation4], 1

</llo_original>
